<compile_context>
chip_gen: v7x
topology: tpu7x:2x2x1
jax: 0.10.0
libtpu: 0.0.40
codegen_flags: <defaults>
</compile_context>

<pallas_src>
import functools

import jax
import jax.numpy as jnp
from jax import lax
from jax.experimental import pallas as pl
from jax.experimental.pallas import tpu as pltpu


def _ceil_to(x, m):
    return (x + m - 1) // m * m


def _matmul_lrelu_kernel(x_ref, w_ref, o_ref, *, negative_slope):
    # x_ref: (1, K, TS)       bf16 im2col tile; spatial positions on lanes (TS % 128 == 0)
    # w_ref: (Cout_p, K)      bf16 flattened weight (grid-invariant block)
    # o_ref: (1, Cout_p, TS)  f32 output tile in NC(HW) layout (no post-transpose needed)
    acc = jnp.dot(w_ref[...], x_ref[0], preferred_element_type=jnp.float32)
    # Fused LeakyReLU (PyTorch default negative_slope=0.01), in f32.
    o_ref[0] = jnp.where(acc > 0, acc, negative_slope * acc).astype(o_ref.dtype)


def basic_conv2d_forward(x_nchw, weight_oihw, *, padding=0, negative_slope=0.01,
                         compute_dtype=jnp.bfloat16, spatial_tile=512):
    """Conv2d(bias=False, stride=1, padding=padding) + LeakyReLU; NCHW in/out."""
    N, Cin, H, W = x_nchw.shape
    Cout, Cin_w, kh, kw = weight_oihw.shape
    assert Cin == Cin_w, "channel mismatch"
    assert padding >= 0
    out_dtype = x_nchw.dtype

    Hp, Wp = H + 2 * padding, W + 2 * padding
    Ho, Wo = Hp - kh + 1, Wp - kw + 1
    K = Cin * kh * kw
    S = Ho * Wo

    # ---- wrapper-side im2col (single fused XLA pass; channel-major K order) ----
    x = x_nchw.astype(compute_dtype)
    if padding > 0:
        x = jnp.pad(x, ((0, 0), (0, 0), (padding, padding), (padding, padding)))
    taps = []
    for i in range(kh):
        for j in range(kw):
            taps.append(lax.slice(x, (0, 0, i, j), (N, Cin, i + Ho, j + Wo)))
    # (N, Cin, kh*kw, Ho, Wo) -> (N, K, S); K index = c*(kh*kw) + i*kw + j,
    # which matches the contiguous flatten of the PyTorch (Cout, Cin, kh, kw) weight.
    xcol = jnp.stack(taps, axis=2).reshape(N, K, S)

    # Spatial axis on lanes: pad to a multiple of the (128-aligned) tile size.
    tile_s = min(spatial_tile, _ceil_to(S, 128))
    S_pad = _ceil_to(S, tile_s)
    if S_pad != S:
        xcol = jnp.pad(xcol, ((0, 0), (0, 0), (0, S_pad - S)))

    # Cout only needs sublane alignment (8), not 128 -> minimal output bytes.
    Cout_pad = _ceil_to(Cout, 8)
    w2 = weight_oihw.reshape(Cout, K).astype(compute_dtype)   # contiguous, no transpose
    if Cout_pad != Cout:
        w2 = jnp.pad(w2, ((0, Cout_pad - Cout), (0, 0)))

    kernel = functools.partial(_matmul_lrelu_kernel, negative_slope=negative_slope)
    num_s = S_pad // tile_s

    out = pl.pallas_call(
        kernel,
        out_shape=jax.ShapeDtypeStruct((N, Cout_pad, S_pad), out_dtype),
        grid_spec=pltpu.PrefetchScalarGridSpec(
            num_scalar_prefetch=0,
            grid=(N, num_s),
            in_specs=[
                pl.BlockSpec((1, K, tile_s), lambda n, s: (n, 0, s)),
                # Grid-invariant weight block: same index every step -> no re-DMA.
                pl.BlockSpec((Cout_pad, K), lambda n, s: (0, 0)),
            ],
            out_specs=pl.BlockSpec((1, Cout_pad, tile_s), lambda n, s: (n, 0, s)),
        ),
        compiler_params=pltpu.CompilerParams(
            dimension_semantics=("parallel", "parallel")),
    )(xcol, w2)

    # Output is already NCHW-flattened: drop any padding, then a free reshape.
    if Cout_pad != Cout:
        out = out[:, :Cout]
    if S_pad != S:
        out = out[:, :, :S]
    return out.reshape(N, Cout, Ho, Wo)


class BasicConv2d:
    """JAX mirror of the PyTorch BasicConv2d module (Conv2d bias=False + leaky_relu)."""

    def __init__(self, in_channels, out_channels, kernel_size, padding=0, key=None):
        if key is None:
            key = jax.random.PRNGKey(0)
        # Deterministic init with the same fan-based scale as PyTorch's default.
        fan_in = in_channels * kernel_size * kernel_size
        bound = 1.0 / float(fan_in) ** 0.5
        self.weight = jax.random.uniform(
            key, (out_channels, in_channels, kernel_size, kernel_size),
            dtype=jnp.float32, minval=-bound, maxval=bound)
        self.padding = padding

    def __call__(self, x_nchw):
        return basic_conv2d_forward(x_nchw, self.weight, padding=self.padding)


if __name__ == "__main__":
    key = jax.random.PRNGKey(0)
    kx, kw_key = jax.random.split(key)

    # Small shapes consistent with the module: batch=2, C_in=4, 16x16 spatial.
    N, Cin, H, W = 2, 4, 16, 16
    Cout, ksize, pad = 8, 3, 1

    x = jax.random.normal(kx, (N, Cin, H, W), dtype=jnp.float32)

    mod = BasicConv2d(Cin, Cout, ksize, padding=pad, key=kw_key)
    out = jax.block_until_ready(mod(x))

    # Reference: XLA conv + leaky_relu on the *same* bf16-cast operands
    # (bf16 products, f32 accumulation -- matches the kernel's arithmetic).
    ref = jax.lax.conv_general_dilated(
        x.astype(jnp.bfloat16), mod.weight.astype(jnp.bfloat16),
        window_strides=(1, 1), padding=[(pad, pad), (pad, pad)],
        dimension_numbers=("NCHW", "OIHW", "NCHW"),
        preferred_element_type=jnp.float32)
    ref = jnp.where(ref > 0, ref, 0.01 * ref).astype(out.dtype)

    assert out.shape == (N, Cout, H, W)
    assert jnp.allclose(out, ref, atol=5e-4, rtol=5e-4), \
        float(jnp.max(jnp.abs(out - ref)))

    print("KERNEL_OK")
</pallas_src>

<mosaic_0001>
module attributes {stable_mosaic.version = 11 : i64} {
  func.func @_matmul_lrelu_kernel(%arg0: i32, %arg1: i32, %arg2: memref<1x36x256xbf16, #tpu.memory_space<vmem>>, %arg3: memref<8x36xbf16, #tpu.memory_space<vmem>>, %arg4: memref<1x8x256xf32, #tpu.memory_space<vmem>>) attributes {dimension_semantics = [#tpu.dimension_semantics<parallel>, #tpu.dimension_semantics<parallel>], iteration_bounds = array<i64: 2, 1>, scalar_prefetch = 0 : i64, scratch_operands = 0 : i64, tpu.core_type = #tpu.core_type<tc>, window_params = [{transform_indices = @transform_0, window_bounds = array<i64: 1, 36, 256>}, {pipeline_mode = #tpu.pipeline_mode<synchronous>, transform_indices = @transform_1, window_bounds = array<i64: 8, 36>}, {transform_indices = @transform_2, window_bounds = array<i64: 1, 8, 256>}]} {
    %c0 = arith.constant 0 : index
    %c0_0 = arith.constant 0 : index
    %0 = vector.load %arg3[%c0, %c0_0] : memref<8x36xbf16, #tpu.memory_space<vmem>>, vector<8x36xbf16>
    %c0_1 = arith.constant 0 : index
    %c0_2 = arith.constant 0 : index
    %c0_3 = arith.constant 0 : index
    %1 = vector.load %arg2[%c0_1, %c0_2, %c0_3] : memref<1x36x256xbf16, #tpu.memory_space<vmem>>, vector<1x36x256xbf16>
    %2 = vector.shape_cast %1 : vector<1x36x256xbf16> to vector<36x256xbf16>
    %cst = arith.constant dense<0.000000e+00> : vector<8x256xf32>
    %3 = tpu.matmul %0, %2, %cst {dimension_numbers = #tpu.dot_dimension_numbers<[1], [0], [0], [1], [0, 0, 1, 1], [], []>} : vector<8x36xbf16>, vector<36x256xbf16>, vector<8x256xf32> -> vector<8x256xf32>
    %cst_4 = arith.constant 0.000000e+00 : f32
    %4 = vector.broadcast %cst_4 : f32 to vector<8x256xf32>
    %5 = arith.cmpf ogt, %3, %4 : vector<8x256xf32>
    %cst_5 = arith.constant 0.00999999977 : f32
    %6 = vector.broadcast %cst_5 : f32 to vector<8x256xf32>
    %7 = arith.mulf %6, %3 : vector<8x256xf32>
    %8 = arith.select %5, %3, %7 : vector<8x256xi1>, vector<8x256xf32>
    %c0_6 = arith.constant 0 : index
    %c0_7 = arith.constant 0 : index
    %c0_8 = arith.constant 0 : index
    %9 = vector.load %arg4[%c0_6, %c0_7, %c0_8] : memref<1x8x256xf32, #tpu.memory_space<vmem>>, vector<1x8x256xf32>
    %10 = vector.shape_cast %9 : vector<1x8x256xf32> to vector<8x256xf32>
    %11 = vector.shape_cast %8 : vector<8x256xf32> to vector<1x8x256xf32>
    tpu.vector_store %arg4[%c0_6, %c0_7, %c0_8], %11 {strides = array<i32>} : memref<1x8x256xf32, #tpu.memory_space<vmem>>, vector<1x8x256xf32>,
    return
  }
  func.func @transform_0(%arg0: i32, %arg1: i32) -> (i32, i32, i32) {
    %c0_i32 = arith.constant 0 : i32
    %c0_i32_0 = arith.constant 0 : i32
    return %arg0, %c0_i32, %arg1 : i32, i32, i32
  }
  func.func @transform_1(%arg0: i32, %arg1: i32) -> (i32, i32) {
    %c0_i32 = arith.constant 0 : i32
    %c0_i32_0 = arith.constant 0 : i32
    %c0_i32_1 = arith.constant 0 : i32
    return %c0_i32, %c0_i32_0 : i32, i32
  }
  func.func @transform_2(%arg0: i32, %arg1: i32) -> (i32, i32, i32) {
    %c0_i32 = arith.constant 0 : i32
    %c0_i32_0 = arith.constant 0 : i32
    return %arg0, %c0_i32, %arg1 : i32, i32, i32
  }
}

</mosaic_0001>

<llo_original>
// kernel: tpu_custom_call.1
$region0: #{tpu_custom_call.1}
  #allocation0 [shape = 'u32[]', space=smem, size = 0x4, offset = 0x4, fixed_abs, tag = 'smem constant byte address 0x4 - core index']
  #allocation1 [shape = 'u32[144,128]{1,0:T(1,128)}', space=vmem, size = 0x12000, scoped, tag = 'internal scratch']
  %s0 = inlined_call_operand.vmem [shape: bf16[2,36,256], index: 0, kind: input, shape index: {}]
  %s1 = inlined_call_operand.vmem [shape: bf16[8,36], index: 1, kind: input, shape index: {}]
  %s2 = inlined_call_operand.hbm [shape: f32[2,8,256], index: 2, kind: output, shape index: {}]
  %s3 = sld [smem:[#allocation0]]
  $region41: #{tpu_custom_call.1} parent=0
    _
  %s5 = ssub.s32 1, %s3
  %s6 = scalar_select 0, %s5, %s3
  $region1: #{tpu_custom_call.1} parent=0
    #allocation2 [shape = 'u8[16384]{0}', space=vmem, size = 0x4000, scoped, tag = 'output window, operand 0']
    #allocation3 [shape = 's32[2]{0}', space=sflag, size = 0x8, scoped, tag = 'scoped memory for tpu_custom_call.1']
    %7 = vsyncpa [#allocation3], 0
    %s8 = scalar_lea.sflag [#allocation3], 1
    %9 = vsyncpa %s8, 0
    loop: start=0, step=1, limit=4
    $region2: #{tpu_custom_call.1} parent=1 // loop_pre_header
      _
    $region3: #{tpu_custom_call.1} parent=1 // loop_header
      %s11 = sphi 0, %s15
      %p12 = scmp.ge.s32.totalorder %s11, 4
      %s18 = sphi 0, %s30
      %s19 = sphi 0, %s26
      %s20 = sphi 0, %s18
      %s21 = sphi 0, %s19
      %s22 = sphi 0, %s20
      %s23 = sphi 0, %s21
      %s35 = sphi 0, %s37
      %s38 = sphi 0, %s35
      %s39 = sphi 0, %s38
      %s55 = sphi 0, %s39
      %s59 = sphi 0, %s59
      %s61 = sphi 0, %s59
      %s62 = sphi 0, %s61
      %s76 = sphi 0, %s62
      %s84 = sphi 0, %s86
      %s87 = sphi 0, %s84
      %s88 = sphi 0, %s87
      %s104 = sphi 0, %s88
    $region4: #{tpu_custom_call.1} parent=1 // loop_header_branch
      %14 = sbr.rel (%p12) target = $region8
    $region5: #{tpu_custom_call.1} parent=1 // loop_body
      %s16 = ssub.s32 %s11, 1
      %s17 = ssub.s32 %s11, 2
      %s24 = sadd.s32 1, %s19
      %p25 = scmp.ge.s32.totalorder %s24, 1
      %s26 = scalar_select %p25, 0, %s24
      %s27 = sadd.s32 1, %s18
      %s28 = scalar_select %p25, %s27, %s18
      %p29 = scmp.ge.s32.totalorder %s28, 2
      %s30 = scalar_select %p29, 0, %s28
      %s31 = ssub.s32 %s18, %s30
      %s32 = ssub.s32 %s19, %s26
      %s33 = sor.u32 %s31, %s32
      %p34 = scmp.eq.s32.totalorder %s33, 0
      %s36 = sadd.s32 %s35, 1
      %s37 = scalar_select %p34, %s35, %s36
      %p40 = pneg %p34
      %p41 = scmp.eq.s32.totalorder %s11, 1
      %p42 = por %p40, %p41
      %p43 = scmp.ne.s32.totalorder %s35, %s38
      %p44 = scmp.eq.s32.totalorder %s11, 0
      %p45 = por %p43, %p44
      %p46 = scmp.ne.s32.totalorder %s35, %s38
      %p47 = scmp.eq.s32.totalorder %s16, 1
      %p48 = por %p46, %p47
      %p49 = scmp.ne.s32.totalorder %s38, %s39
      %p50 = scmp.eq.s32.totalorder %s16, 0
      %p51 = por %p49, %p50
      %p52 = scmp.ne.s32.totalorder %s38, %s39
      %p53 = scmp.eq.s32.totalorder %s17, 1
      %p54 = por %p52, %p53
      %p56 = scmp.ne.s32.totalorder %s39, %s55
      %p57 = scmp.eq.s32.totalorder %s17, 0
      %p58 = por %p56, %p57
      %s60 = sadd.s32 %s59, 1
      %p63 = scmp.eq.s32.totalorder %s11, 1
      %p64 = scmp.ne.s32.totalorder %s59, %s61
      %p65 = scmp.eq.s32.totalorder %s11, 0
      %p66 = por %p64, %p65
      %p67 = scmp.ne.s32.totalorder %s59, %s61
      %p68 = scmp.eq.s32.totalorder %s16, 1
      %p69 = por %p67, %p68
      %p70 = scmp.ne.s32.totalorder %s61, %s62
      %p71 = scmp.eq.s32.totalorder %s16, 0
      %p72 = por %p70, %p71
      %p73 = scmp.ne.s32.totalorder %s61, %s62
      %p74 = scmp.eq.s32.totalorder %s17, 1
      %p75 = por %p73, %p74
      %p77 = scmp.ne.s32.totalorder %s62, %s76
      %p78 = scmp.eq.s32.totalorder %s17, 0
      %p79 = por %p77, %p78
      %s80 = ssub.s32 %s18, %s30
      %s81 = ssub.s32 %s19, %s26
      %s82 = sor.u32 %s80, %s81
      %p83 = scmp.eq.s32.totalorder %s82, 0
      %s85 = sadd.s32 %s84, 1
      %s86 = scalar_select %p83, %s84, %s85
      %p89 = pneg %p83
      %p90 = scmp.eq.s32.totalorder %s11, 1
      %p91 = por %p89, %p90
      %p92 = scmp.ne.s32.totalorder %s84, %s87
      %p93 = scmp.eq.s32.totalorder %s11, 0
      %p94 = por %p92, %p93
      %p95 = scmp.ne.s32.totalorder %s84, %s87
      %p96 = scmp.eq.s32.totalorder %s16, 1
      %p97 = por %p95, %p96
      %p98 = scmp.ne.s32.totalorder %s87, %s88
      %p99 = scmp.eq.s32.totalorder %s16, 0
      %p100 = por %p98, %p99
      %p101 = scmp.ne.s32.totalorder %s87, %s88
      %p102 = scmp.eq.s32.totalorder %s17, 1
      %p103 = por %p101, %p102
      %p105 = scmp.ne.s32.totalorder %s88, %s104
      %p106 = scmp.eq.s32.totalorder %s17, 0
      %p107 = por %p105, %p106
      %p108 = scmp.le.s32.totalorder 1, %s11
      %p109 = scmp.lt.s32.totalorder %s11, 3
      %p110 = pnand %p108, %p109
      %p111 = pneg %p110
      // Predicated region
      $region9: #{tpu_custom_call.1} parent=5 // pred_check
        _
      $region10: #{tpu_custom_call.1} parent=5 // pred_check_branch
        %113 = sbr.rel (%p110) target = $region12
      $region11: #{tpu_custom_call.1} parent=5 // pred_region
        %s114 = ssub.s32 %s11, 1
        // Predicated region
        $region13: #{tpu_custom_call.1} parent=11 // pred_check
          %p115 = pneg %p72
        $region14: #{tpu_custom_call.1} parent=11 // pred_check_branch
          %117 = sbr.rel (%p115) target = $region16
        $region15: #{tpu_custom_call.1} parent=11 // pred_region
          _
        $region16: #{tpu_custom_call.1} parent=11 // pred_fallthru
          _
      $region12: #{tpu_custom_call.1} parent=5 // pred_fallthru
        _
      %p118 = scmp.lt.s32.totalorder %s11, 2
      // Predicated region
      $region17: #{tpu_custom_call.1} parent=5 // pred_check
        %p119 = pneg %p118
      $region18: #{tpu_custom_call.1} parent=5 // pred_check_branch
        %121 = sbr.rel (%p119) target = $region20
      $region19: #{tpu_custom_call.1} parent=5 // pred_region
        // Predicated region
        $region21: #{tpu_custom_call.1} parent=19 // pred_check
          %p122 = pneg %p45
        $region22: #{tpu_custom_call.1} parent=19 // pred_check_branch
          %124 = sbr.rel (%p122) target = $region24
        $region23: #{tpu_custom_call.1} parent=19 // pred_region
          %s125 = smul.u32 2, %s19
          %p126 = scmp.lt.s32.totalorder %s18, 1
          %s127 = scalar_select %p126, %s18, 1
          %p128 = scmp.lt.s32.totalorder %s125, 1
          %s129 = scalar_select %p128, %s125, 1
          %s130 = smul.addr %s127, 10
          %s131 = sadd.s32 %s129, %s130
          %s132 = smul.addr %s131, 4
          %s133 = scalar_lea.vmem %s0, %s132
          %s134 = smul.u32 2, %s19
        $region24: #{tpu_custom_call.1} parent=19 // pred_fallthru
          _
      $region20: #{tpu_custom_call.1} parent=5 // pred_fallthru
        _
      %p135 = scmp.le.s32.totalorder 1, %s11
      %p136 = scmp.lt.s32.totalorder %s11, 3
      %p137 = pnand %p135, %p136
      %p138 = pneg %p137
      // Predicated region
      $region25: #{tpu_custom_call.1} parent=5 // pred_check
        _
      $region26: #{tpu_custom_call.1} parent=5 // pred_check_branch
        %140 = sbr.rel (%p137) target = $region28
      $region27: #{tpu_custom_call.1} parent=5 // pred_region
        %s141 = ssub.s32 %s11, 1
        %s142 = smul.u32 2, %s21
        %p143 = scmp.lt.s32.totalorder %s20, 1
        %s144 = scalar_select %p143, %s20, 1
        %p145 = scmp.lt.s32.totalorder %s142, 1
        %s146 = scalar_select %p145, %s142, 1
        %s147 = smul.addr %s144, 10
        %s148 = sadd.s32 %s146, %s147
        %s149 = smul.addr %s148, 4
        %s150 = scalar_lea.vmem %s0, %s149
        %p151 = pneg %p51
        %p152 = pneg %p48
        %p153 = pneg %p72
        %p154 = pneg %p69
        %p155 = pneg %p100
        %p156 = pneg %p97
        %s157 = sand.u32 %s87, 1
        %s158 = scalar_lea.sflag [#allocation3], %s157
        %s159 = sand.u32 %s87, 1
        %s160 = smul.addr %s159, 16
        %s161 = scalar_lea.vmem [#allocation2], %s160
        %s162 = smul.u32 2, %s21
        %p163 = scmp.lt.s32.totalorder %s20, 1
        %s164 = scalar_select %p163, %s20, 1
        %p165 = scmp.lt.s32.totalorder %s162, 1
        %s166 = scalar_select %p165, %s162, 1
        %s167 = smul.addr %s164, 10
        %s168 = sadd.s32 %s166, %s167
        %s169 = smul.addr %s168, 4
        %s170 = scalar_lea.vmem %s0, %s169
        %s171 = smul.u32 2, %s21
        %s172 = smul.u32 2, %s21
        %v174 = vld [vmem:[%s1] sm:$0xf]
        %v175 = vld [vmem:[%s170] sm:$0xff]
        %v176 = vld [vmem:[%s170 + $0x8] sm:$0xff]
        %v177 = vld [vmem:[%s170 + $0x10] sm:$0xff]
        %v178 = vld [vmem:[%s170 + $0x18] sm:$0xff]
        %v179 = vld [vmem:[%s170 + $0x20] sm:$0x33]
        %v185 = vunpack.c.l.b16 %v175
        %v186 = vunpack.c.h.b16 %v175
        %v187 = vunpack.c.l.b16 %v176
        %v188 = vunpack.c.h.b16 %v176
        %v189 = vunpack.c.l.b16 %v177
        %v190 = vunpack.c.h.b16 %v177
        %v191 = vunpack.c.l.b16 %v178
        %v192 = vunpack.c.h.b16 %v178
        %v193 = vunpack.c.l.b16 %v179
        %v194 = vunpack.c.h.b16 %v179
        %v195 = vpack.c.b16 %v187, %v185
        %v196 = vpack.c.b16 %v188, %v186
        %v197 = vpack.c.b16 %v191, %v189
        %v198 = vpack.c.b16 %v192, %v190
        %v199 = vpack.c.b16 %v193, %v193
        %v200 = vpack.c.b16 %v194, %v194
        %vm205 = vcmask 293888
        %v207 = vsel %vm205, %v174, 0
        %vm209 = vcmask 1041408
        %v211 = vsel %vm209, %v199, 0
        %v214 = vsel %vm209, %v200, 0
        %216 = vmatprep.subr.bf16.mxu0 %v196
        %217 = vmatpush1.bf16.msra.mxu0 %v195
        %218 = vmatprep.subr.bf16.mxu0 %v198
        %219 = vmatpush1.bf16.msra.mxu0 %v197
        %220 = vmatprep.subr.bf16.mxu0 %v214
        %221 = vmatpush1.bf16.msra.mxu0 %v211
        %222 = vmatprep.subr.bf16.mxu0 0
        %223 = vmatpush1.bf16.msra.mxu0 0
        %224 = vmatprep.subr.bf16.mxu0 0
        %225 = vmatpush1.bf16.msra.mxu0 0
        %226 = vmatprep.subr.bf16.mxu0 0
        %227 = vmatpush1.bf16.msra.mxu0 0
        %228 = vmatprep.subr.bf16.mxu0 0
        %229 = vmatpush1.bf16.msra.mxu0 0
        %230 = vmatprep.subr.bf16.mxu0 0
        %231 = vmatpush1.bf16.msra.mxu0 0
        %232 = vmatprep.subr.bf16.mxu0 0
        %233 = vmatpush1.bf16.msra.mxu0 0
        %234 = vmatprep.subr.bf16.mxu0 0
        %235 = vmatpush1.bf16.msra.mxu0 0
        %236 = vmatprep.subr.bf16.mxu0 0
        %237 = vmatpush1.bf16.msra.mxu0 0
        %238 = vmatprep.subr.bf16.mxu0 0
        %239 = vmatpush1.bf16.msra.mxu0 0
        %240 = vmatprep.subr.bf16.mxu0 0
        %241 = vmatpush1.bf16.msra.mxu0 0
        %242 = vmatprep.subr.bf16.mxu0 0
        %243 = vmatpush1.bf16.msra.mxu0 0
        %244 = vmatprep.subr.bf16.mxu0 0
        %245 = vmatpush1.bf16.msra.mxu0 0
        %246 = vmatprep.subr.bf16.mxu0 0
        %247 = vmatpush1.bf16.msra.mxu0 0
        %248 = vmatprep.mubr.bf16.mxu0 0
        %249 = vmatmul.mubr.bf16.gmra.mrb[0].mxu0 %v207
        %v250 = vpop.f32.mrb[0].mxu0
        %v251 = vadd.f32 0.0, %v250
        %v252 = vpop.f32.mrb[0].mxu0
        %v253 = vadd.f32 0.0, %v252
        %v254 = vpop.f32.mrb[0].mxu0
        %v255 = vpop.f32.mrb[0].mxu0
        %256 = vdwg.mxu0
        %vm257 = vcmp.gt.f32.partialorder %v251, 0.0
        %vm258 = vcmp.gt.f32.partialorder %v253, 0.0
        %v259 = vmul.f32 %v251, 0.01
        %v260 = vmul.f32 %v253, 0.01
        %v261 = vsel %vm257, %v251, %v259
        %v262 = vsel %vm258, %v253, %v260
        %263 = vst [vmem:[%s161] sm:$0xff] %v261
        %264 = vst [vmem:[%s161 + $0x8] sm:$0xff] %v262
        %s265 = sand.u32 %s87, 1
        %s266 = scalar_lea.sflag [#allocation3], %s265
        %s267 = sand.u32 %s87, 1
        %s268 = smul.addr %s267, 16
        %s269 = scalar_lea.vmem [#allocation2], %s268
        // Predicated region
        $region29: #{tpu_custom_call.1} parent=27 // pred_check
          %p270 = pneg %p97
        $region30: #{tpu_custom_call.1} parent=27 // pred_check_branch
          %272 = sbr.rel (%p270) target = $region32
        $region31: #{tpu_custom_call.1} parent=27 // pred_region
          %s273 = smul.u32 2, %s21
          %s275 = ssub.s32 256, 256
          %276 = vsyncadd %s266, %s275
          %s277 = smul.addr %s20, 2
          %s278 = sadd.s32 %s273, %s277
          %s279 = smul.addr %s278, 128
          %s280 = scalar_lea.hbm %s2, %s279
          %s282 = sshll.u32 %s269, 4
          %s283 = int_to_ptr.vmem [resolvable:$true] %s282
          %285 = dma.vmem_to_hbm [thread:$0]  %s283, 256, %s280, %s266
        $region32: #{tpu_custom_call.1} parent=27 // pred_fallthru
          _
      $region28: #{tpu_custom_call.1} parent=5 // pred_fallthru
        _
      %p286 = scmp.le.s32.totalorder 2, %s11
      // Predicated region
      $region33: #{tpu_custom_call.1} parent=5 // pred_check
        %p287 = pneg %p286
      $region34: #{tpu_custom_call.1} parent=5 // pred_check_branch
        %289 = sbr.rel (%p287) target = $region36
      $region35: #{tpu_custom_call.1} parent=5 // pred_region
        %s290 = ssub.s32 %s11, 2
        // Predicated region
        $region37: #{tpu_custom_call.1} parent=35 // pred_check
          %p291 = pneg %p103
        $region38: #{tpu_custom_call.1} parent=35 // pred_check_branch
          %293 = sbr.rel (%p291) target = $region40
        $region39: #{tpu_custom_call.1} parent=35 // pred_region
          %s294 = sand.u32 %s88, 1
          %s295 = scalar_lea.sflag [#allocation3], %s294
          %s296 = sand.u32 %s88, 1
          %s297 = smul.addr %s296, 16
          %s298 = scalar_lea.vmem [#allocation2], %s297
          %299 = dma.done %s295, 256
        $region40: #{tpu_custom_call.1} parent=35 // pred_fallthru
          _
      $region36: #{tpu_custom_call.1} parent=5 // pred_fallthru
        _
    $region6: #{tpu_custom_call.1} parent=1 // loop_footer
      %s15 = sadd.s32 1, %s11
    $region7: #{tpu_custom_call.1} parent=1 // loop_footer_branch
      %10 = sbr.rel target = $region3
    $region8: #{tpu_custom_call.1} parent=1 // loop_exit
      _
    %300 = vsyncpa [#allocation3], 1
    %s301 = scalar_lea.sflag [#allocation3], 1
    %302 = vsyncpa %s301, 1

</llo_original>
